<compile_context>
chip_gen: v7x
topology: tpu7x:2x2x1
jax: 0.10.0
libtpu: 0.0.40
codegen_flags: <defaults>
</compile_context>

<pallas_src>
import functools

import jax
import jax.numpy as jnp
from jax import lax
from jax.experimental import pallas as pl
from jax.experimental.pallas import tpu as pltpu

LANE = 128
SUBLANE = 8


def _round_up(n, m):
    return ((n + m - 1) // m) * m


def _pad2(a, rows, cols):
    r, c = a.shape
    return jnp.pad(a, ((0, rows - r), (0, cols - c)))


def _tpu_generation_info():
    """Best-effort (tensorcores_per_device, per-core VMEM budget in bytes)."""
    try:
        kind = jax.devices()[0].device_kind.lower()
    except Exception:
        kind = ""
    if "v7" in kind or "7x" in kind:
        # v7x: 2 TensorCores/chip, 64 MiB VMEM per TC -> leave headroom.
        return 2, 40 * 1024 * 1024
    # v5e / v6e: 1 TensorCore, 128 MiB physical VMEM.
    return 1, 96 * 1024 * 1024


def generator_kernel(x_ref, w1_ref, b1_ref, w2_ref, b2_ref,
                     gamma_ref, beta_ref, w3_ref, b3_ref, o_ref,
                     *, true_in):
    x = x_ref[...]                                           # (bm, IN_P) f32

    # --- gen: Linear(in, hidden) -> LeakyReLU(0.01) -> Linear(hidden, in) ---
    # bf16 MXU operands, f32 accumulation; elementwise math stays f32.
    h = jnp.dot(x.astype(jnp.bfloat16), w1_ref[...],
                preferred_element_type=jnp.float32) + b1_ref[...]
    h = jnp.where(h >= 0, h, 0.01 * h)                       # LeakyReLU(0.01)
    y = jnp.dot(h.astype(jnp.bfloat16), w2_ref[...],
                preferred_element_type=jnp.float32) + b2_ref[...]

    # --- residual add ---
    y = y + x                                                # (bm, IN_P)

    # --- LayerNorm over the true IN columns ---
    # Padded columns of y are exactly zero, so the un-masked sums are exact;
    # gamma/beta zero-padding re-zeroes padded output columns.
    inv_n = 1.0 / float(true_in)
    mean = jnp.sum(y, axis=-1, keepdims=True) * inv_n
    var = jnp.sum(y * y, axis=-1, keepdims=True) * inv_n - mean * mean
    y_norm = (y - mean) * lax.rsqrt(var + 1e-5) * gamma_ref[...] + beta_ref[...]

    # --- classifier: Linear(in, out) ---
    out = jnp.dot(y_norm.astype(jnp.bfloat16), w3_ref[...],
                  preferred_element_type=jnp.float32) + b3_ref[...]
    o_ref[...] = out.astype(o_ref.dtype)


def generator_forward(x, params, *, block_m=512):
    """x: (B, in_features) float32. params: dict of (fan_in, fan_out) weights."""
    B, IN = x.shape
    HID = params["w1"].shape[1]
    OUT = params["w3"].shape[1]

    IN_P = _round_up(IN, LANE)
    HID_P = _round_up(HID, LANE)
    OUT_P = _round_up(OUT, LANE)

    n_tc, vmem_budget = _tpu_generation_info()

    # ---- row-tile / grid policy -------------------------------------------
    B8 = _round_up(B, SUBLANE)

    # Resident bf16 weights + f32 biases / LN params (single-buffered).
    weight_bytes = 2 * (IN_P * HID_P + HID_P * IN_P + IN_P * OUT_P)
    weight_bytes += 4 * (HID_P + 3 * IN_P + OUT_P)
    # Per-row VMEM: streamed x tile (f32, 2 bufs) + out tile (f32, 2 bufs)
    # + f32 intermediates h / y / y_norm.
    per_row_bytes = 2 * IN_P * 4 + 2 * OUT_P * 4 + (HID_P + 2 * IN_P) * 4
    bm_vmem_cap = (vmem_budget // 2 - weight_bytes) // per_row_bytes
    bm_vmem_cap = max(SUBLANE, (bm_vmem_cap // SUBLANE) * SUBLANE)

    block_m = _round_up(max(int(block_m), SUBLANE), SUBLANE)
    bm_max = min(block_m, bm_vmem_cap)
    if n_tc >= 2 and B8 >= 2 * SUBLANE:
        # Dual-TC parts (v7x): keep >= 2 grid steps so both cores get work.
        # TODO(synk): if "parallel" alone does not shard across v7x cores,
        # switch this axis to pltpu.CORE_PARALLEL.
        bm_max = min(bm_max, _round_up(pl.cdiv(B8, 2), SUBLANE))
    bm_max = max(bm_max, SUBLANE)

    grid_n = pl.cdiv(B8, bm_max)
    bm = _round_up(pl.cdiv(B8, grid_n), SUBLANE)     # even split, <8 wasted rows/tile
    B_P = bm * grid_n

    # ---- lane-dense zero-padding; weights cast to bf16 (MXU-native) --------
    xp = _pad2(x.astype(jnp.float32), B_P, IN_P)
    w1 = _pad2(params["w1"], IN_P, HID_P).astype(jnp.bfloat16)
    b1 = _pad2(params["b1"], 1, HID_P).astype(jnp.float32)
    w2 = _pad2(params["w2"], HID_P, IN_P).astype(jnp.bfloat16)
    b2 = _pad2(params["b2"], 1, IN_P).astype(jnp.float32)
    gamma = _pad2(params["gamma"], 1, IN_P).astype(jnp.float32)
    beta = _pad2(params["beta"], 1, IN_P).astype(jnp.float32)
    w3 = _pad2(params["w3"], IN_P, OUT_P).astype(jnp.bfloat16)
    b3 = _pad2(params["b3"], 1, OUT_P).astype(jnp.float32)

    def row_map(i):
        return (i, 0)

    def full_map(i):
        return (0, 0)

    vmem_need = (2 * bm * IN_P * 4 + 2 * bm * OUT_P * 4
                 + weight_bytes + bm * (HID_P + 2 * IN_P) * 4)
    vmem_limit = int(min(vmem_budget, max(16 * 1024 * 1024, 2 * vmem_need)))

    cost = pl.CostEstimate(
        flops=2 * B * (IN * HID + HID * IN + IN * OUT),
        transcendentals=B,                     # one rsqrt per row
        bytes_accessed=(xp.size * 4 + B_P * OUT_P * 4
                        + (w1.size + w2.size + w3.size) * 2
                        + (b1.size + b2.size + b3.size
                           + gamma.size + beta.size) * 4),
    )

    def build_and_call(single_buffer_weights):
        if single_buffer_weights:
            def resident(shape):
                return pl.BlockSpec(shape, full_map, pipeline_mode=pl.Buffered(1))
        else:
            def resident(shape):
                return pl.BlockSpec(shape, full_map)

        return pl.pallas_call(
            functools.partial(generator_kernel, true_in=IN),
            out_shape=jax.ShapeDtypeStruct((B_P, OUT_P), jnp.float32),
            grid=(grid_n,),
            in_specs=[
                pl.BlockSpec((bm, IN_P), row_map),     # x (streamed row tiles)
                resident((IN_P, HID_P)),               # w1 (resident)
                resident((1, HID_P)),                  # b1
                resident((HID_P, IN_P)),               # w2
                resident((1, IN_P)),                   # b2
                resident((1, IN_P)),                   # layernorm gamma
                resident((1, IN_P)),                   # layernorm beta
                resident((IN_P, OUT_P)),               # w3 (classifier)
                resident((1, OUT_P)),                  # b3
            ],
            out_specs=pl.BlockSpec((bm, OUT_P), row_map),
            compiler_params=pltpu.CompilerParams(
                dimension_semantics=("parallel",),
                vmem_limit_bytes=vmem_limit),
            cost_estimate=cost,
        )(xp, w1, b1, w2, b2, gamma, beta, w3, b3)

    try:
        out = build_and_call(True)
    except Exception:
        # Fallback if this jax build rejects pipeline_mode=pl.Buffered(1).
        out = build_and_call(False)

    return out[:B, :OUT]


def init_params(key, in_features, hidden_dims, out_features):
    """Deterministic synthetic init. Weights stored as (fan_in, fan_out)."""
    k1, k2, k3, k4, k5, k6 = jax.random.split(key, 6)

    def uniform(k, shape, fan_in):
        bound = 1.0 / jnp.sqrt(fan_in)
        return jax.random.uniform(k, shape, jnp.float32, -bound, bound)

    return {
        "w1": uniform(k1, (in_features, hidden_dims), in_features),
        "b1": uniform(k2, (1, hidden_dims), in_features),
        "w2": uniform(k3, (hidden_dims, in_features), hidden_dims),
        "b2": uniform(k4, (1, in_features), hidden_dims),
        "gamma": jnp.ones((1, in_features), jnp.float32),
        "beta": jnp.zeros((1, in_features), jnp.float32),
        "w3": uniform(k5, (in_features, out_features), in_features),
        "b3": uniform(k6, (1, out_features), in_features),
    }


def reference_forward(x, p):
    """Pure-JAX f32 reference matching the PyTorch module semantics."""
    h = x @ p["w1"] + p["b1"]
    h = jnp.where(h >= 0, h, 0.01 * h)
    y = h @ p["w2"] + p["b2"] + x
    mean = jnp.mean(y, axis=-1, keepdims=True)
    var = jnp.mean((y - mean) ** 2, axis=-1, keepdims=True)
    y = (y - mean) / jnp.sqrt(var + 1e-5) * p["gamma"] + p["beta"]
    return y @ p["w3"] + p["b3"]


def reference_forward_bf16(x, p):
    """Reference that mirrors the kernel's bf16-matmul / f32-accumulate path."""
    bf = jnp.bfloat16
    h = jnp.dot(x.astype(bf), p["w1"].astype(bf),
                preferred_element_type=jnp.float32) + p["b1"]
    h = jnp.where(h >= 0, h, 0.01 * h)
    y = jnp.dot(h.astype(bf), p["w2"].astype(bf),
                preferred_element_type=jnp.float32) + p["b2"] + x
    mean = jnp.mean(y, axis=-1, keepdims=True)
    var = jnp.mean(y * y, axis=-1, keepdims=True) - mean * mean
    yn = (y - mean) * lax.rsqrt(var + 1e-5) * p["gamma"] + p["beta"]
    return jnp.dot(yn.astype(bf), p["w3"].astype(bf),
                   preferred_element_type=jnp.float32) + p["b3"]


if __name__ == "__main__":
    batch = 8
    in_features = 32
    hidden_dims = 64
    out_features = 16

    key = jax.random.PRNGKey(0)
    kx, kp = jax.random.split(key)
    x = jax.random.normal(kx, (batch, in_features), jnp.float32)
    params = init_params(kp, in_features, hidden_dims, out_features)

    out = generator_forward(x, params)
    out = jax.block_until_ready(out)
    assert out.shape == (batch, out_features)
    assert jnp.all(jnp.isfinite(out)), "non-finite output"

    # Tight check against a reference using the same bf16-matmul path.
    ref_bf16 = reference_forward_bf16(x, params)
    assert jnp.allclose(out, ref_bf16, atol=2e-3, rtol=2e-3), "mismatch vs bf16 reference"

    # Loose semantic check against the f32 PyTorch-equivalent reference.
    ref_f32 = reference_forward(x, params)
    assert jnp.allclose(out, ref_f32, atol=1e-1, rtol=1e-1), "mismatch vs f32 reference"

    print("KERNEL_OK")
</pallas_src>

<mosaic_0001>
module attributes {stable_mosaic.version = 11 : i64} {
  func.func @generator_kernel(%arg0: i32, %arg1: memref<8x128xf32, #tpu.memory_space<vmem>>, %arg2: memref<128x128xbf16, #tpu.memory_space<vmem>>, %arg3: memref<1x128xf32, #tpu.memory_space<vmem>>, %arg4: memref<128x128xbf16, #tpu.memory_space<vmem>>, %arg5: memref<1x128xf32, #tpu.memory_space<vmem>>, %arg6: memref<1x128xf32, #tpu.memory_space<vmem>>, %arg7: memref<1x128xf32, #tpu.memory_space<vmem>>, %arg8: memref<128x128xbf16, #tpu.memory_space<vmem>>, %arg9: memref<1x128xf32, #tpu.memory_space<vmem>>, %arg10: memref<8x128xf32, #tpu.memory_space<vmem>>) attributes {dimension_semantics = [#tpu.dimension_semantics<parallel>], iteration_bounds = array<i64: 1>, scalar_prefetch = 0 : i64, scratch_operands = 0 : i64, tpu.core_type = #tpu.core_type<tc>, window_params = [{transform_indices = @transform_0, window_bounds = array<i64: 8, 128>}, {pipeline_mode = #tpu.pipeline_mode<synchronous>, transform_indices = @transform_1, window_bounds = array<i64: 128, 128>}, {pipeline_mode = #tpu.pipeline_mode<synchronous>, transform_indices = @transform_2, window_bounds = array<i64: 1, 128>}, {pipeline_mode = #tpu.pipeline_mode<synchronous>, transform_indices = @transform_3, window_bounds = array<i64: 128, 128>}, {pipeline_mode = #tpu.pipeline_mode<synchronous>, transform_indices = @transform_4, window_bounds = array<i64: 1, 128>}, {pipeline_mode = #tpu.pipeline_mode<synchronous>, transform_indices = @transform_5, window_bounds = array<i64: 1, 128>}, {pipeline_mode = #tpu.pipeline_mode<synchronous>, transform_indices = @transform_6, window_bounds = array<i64: 1, 128>}, {pipeline_mode = #tpu.pipeline_mode<synchronous>, transform_indices = @transform_7, window_bounds = array<i64: 128, 128>}, {pipeline_mode = #tpu.pipeline_mode<synchronous>, transform_indices = @transform_8, window_bounds = array<i64: 1, 128>}, {transform_indices = @transform_9, window_bounds = array<i64: 8, 128>}]} {
    %c0 = arith.constant 0 : index
    %c0_0 = arith.constant 0 : index
    %0 = vector.load %arg1[%c0, %c0_0] : memref<8x128xf32, #tpu.memory_space<vmem>>, vector<8x128xf32>
    %1 = arith.truncf %0 : vector<8x128xf32> to vector<8x128xbf16>
    %c0_1 = arith.constant 0 : index
    %c0_2 = arith.constant 0 : index
    %2 = vector.load %arg2[%c0_1, %c0_2] : memref<128x128xbf16, #tpu.memory_space<vmem>>, vector<128x128xbf16>
    %cst = arith.constant dense<0.000000e+00> : vector<8x128xf32>
    %3 = tpu.matmul %1, %2, %cst {dimension_numbers = #tpu.dot_dimension_numbers<[1], [0], [0], [1], [0, 0, 1, 1], [], []>} : vector<8x128xbf16>, vector<128x128xbf16>, vector<8x128xf32> -> vector<8x128xf32>
    %c0_3 = arith.constant 0 : index
    %c0_4 = arith.constant 0 : index
    %4 = vector.load %arg3[%c0_3, %c0_4] : memref<1x128xf32, #tpu.memory_space<vmem>>, vector<1x128xf32>
    %5 = vector.broadcast %4 : vector<1x128xf32> to vector<8x128xf32>
    %6 = arith.addf %3, %5 : vector<8x128xf32>
    %cst_5 = arith.constant 0.000000e+00 : f32
    %7 = vector.broadcast %cst_5 : f32 to vector<8x128xf32>
    %8 = arith.cmpf oge, %6, %7 : vector<8x128xf32>
    %cst_6 = arith.constant 0.00999999977 : f32
    %9 = vector.broadcast %cst_6 : f32 to vector<8x128xf32>
    %10 = arith.mulf %9, %6 : vector<8x128xf32>
    %11 = arith.select %8, %6, %10 : vector<8x128xi1>, vector<8x128xf32>
    %12 = arith.truncf %11 : vector<8x128xf32> to vector<8x128xbf16>
    %c0_7 = arith.constant 0 : index
    %c0_8 = arith.constant 0 : index
    %13 = vector.load %arg4[%c0_7, %c0_8] : memref<128x128xbf16, #tpu.memory_space<vmem>>, vector<128x128xbf16>
    %cst_9 = arith.constant dense<0.000000e+00> : vector<8x128xf32>
    %14 = tpu.matmul %12, %13, %cst_9 {dimension_numbers = #tpu.dot_dimension_numbers<[1], [0], [0], [1], [0, 0, 1, 1], [], []>} : vector<8x128xbf16>, vector<128x128xbf16>, vector<8x128xf32> -> vector<8x128xf32>
    %c0_10 = arith.constant 0 : index
    %c0_11 = arith.constant 0 : index
    %15 = vector.load %arg5[%c0_10, %c0_11] : memref<1x128xf32, #tpu.memory_space<vmem>>, vector<1x128xf32>
    %16 = vector.broadcast %15 : vector<1x128xf32> to vector<8x128xf32>
    %17 = arith.addf %14, %16 : vector<8x128xf32>
    %18 = arith.addf %17, %0 : vector<8x128xf32>
    %cst_12 = arith.constant dense<0.000000e+00> : vector<8xf32>
    %19 = vector.multi_reduction <add>, %18, %cst_12 [1] : vector<8x128xf32> to vector<8xf32>
    %20 = vector.shape_cast %19 : vector<8xf32> to vector<8x1xf32>
    %cst_13 = arith.constant 3.125000e-02 : f32
    %21 = vector.broadcast %cst_13 : f32 to vector<8x1xf32>
    %22 = arith.mulf %20, %21 : vector<8x1xf32>
    %23 = arith.mulf %18, %18 : vector<8x128xf32>
    %cst_14 = arith.constant dense<0.000000e+00> : vector<8xf32>
    %24 = vector.multi_reduction <add>, %23, %cst_14 [1] : vector<8x128xf32> to vector<8xf32>
    %25 = vector.shape_cast %24 : vector<8xf32> to vector<8x1xf32>
    %cst_15 = arith.constant 3.125000e-02 : f32
    %26 = vector.broadcast %cst_15 : f32 to vector<8x1xf32>
    %27 = arith.mulf %25, %26 : vector<8x1xf32>
    %28 = arith.mulf %22, %22 : vector<8x1xf32>
    %29 = arith.subf %27, %28 : vector<8x1xf32>
    %30 = vector.broadcast %22 : vector<8x1xf32> to vector<8x128xf32>
    %31 = arith.subf %18, %30 : vector<8x128xf32>
    %cst_16 = arith.constant 9.99999974E-6 : f32
    %32 = vector.broadcast %cst_16 : f32 to vector<8x1xf32>
    %33 = arith.addf %29, %32 : vector<8x1xf32>
    %34 = math.rsqrt %33 : vector<8x1xf32>
    %35 = vector.broadcast %34 : vector<8x1xf32> to vector<8x128xf32>
    %36 = arith.mulf %31, %35 : vector<8x128xf32>
    %c0_17 = arith.constant 0 : index
    %c0_18 = arith.constant 0 : index
    %37 = vector.load %arg6[%c0_17, %c0_18] : memref<1x128xf32, #tpu.memory_space<vmem>>, vector<1x128xf32>
    %38 = vector.broadcast %37 : vector<1x128xf32> to vector<8x128xf32>
    %39 = arith.mulf %36, %38 : vector<8x128xf32>
    %c0_19 = arith.constant 0 : index
    %c0_20 = arith.constant 0 : index
    %40 = vector.load %arg7[%c0_19, %c0_20] : memref<1x128xf32, #tpu.memory_space<vmem>>, vector<1x128xf32>
    %41 = vector.broadcast %40 : vector<1x128xf32> to vector<8x128xf32>
    %42 = arith.addf %39, %41 : vector<8x128xf32>
    %43 = arith.truncf %42 : vector<8x128xf32> to vector<8x128xbf16>
    %c0_21 = arith.constant 0 : index
    %c0_22 = arith.constant 0 : index
    %44 = vector.load %arg8[%c0_21, %c0_22] : memref<128x128xbf16, #tpu.memory_space<vmem>>, vector<128x128xbf16>
    %cst_23 = arith.constant dense<0.000000e+00> : vector<8x128xf32>
    %45 = tpu.matmul %43, %44, %cst_23 {dimension_numbers = #tpu.dot_dimension_numbers<[1], [0], [0], [1], [0, 0, 1, 1], [], []>} : vector<8x128xbf16>, vector<128x128xbf16>, vector<8x128xf32> -> vector<8x128xf32>
    %c0_24 = arith.constant 0 : index
    %c0_25 = arith.constant 0 : index
    %46 = vector.load %arg9[%c0_24, %c0_25] : memref<1x128xf32, #tpu.memory_space<vmem>>, vector<1x128xf32>
    %47 = vector.broadcast %46 : vector<1x128xf32> to vector<8x128xf32>
    %48 = arith.addf %45, %47 : vector<8x128xf32>
    %c0_26 = arith.constant 0 : index
    %c0_27 = arith.constant 0 : index
    %49 = vector.load %arg10[%c0_26, %c0_27] : memref<8x128xf32, #tpu.memory_space<vmem>>, vector<8x128xf32>
    tpu.vector_store %arg10[%c0_26, %c0_27], %48 {strides = array<i32>} : memref<8x128xf32, #tpu.memory_space<vmem>>, vector<8x128xf32>,
    return
  }
  func.func @transform_0(%arg0: i32) -> (i32, i32) {
    %c0_i32 = arith.constant 0 : i32
    %c0_i32_0 = arith.constant 0 : i32
    return %arg0, %c0_i32 : i32, i32
  }
  func.func @transform_1(%arg0: i32) -> (i32, i32) {
    %c0_i32 = arith.constant 0 : i32
    %c0_i32_0 = arith.constant 0 : i32
    %c0_i32_1 = arith.constant 0 : i32
    return %c0_i32, %c0_i32_0 : i32, i32
  }
  func.func @transform_2(%arg0: i32) -> (i32, i32) {
    %c0_i32 = arith.constant 0 : i32
    %c0_i32_0 = arith.constant 0 : i32
    %c0_i32_1 = arith.constant 0 : i32
    return %c0_i32, %c0_i32_0 : i32, i32
  }
  func.func @transform_3(%arg0: i32) -> (i32, i32) {
    %c0_i32 = arith.constant 0 : i32
    %c0_i32_0 = arith.constant 0 : i32
    %c0_i32_1 = arith.constant 0 : i32
    return %c0_i32, %c0_i32_0 : i32, i32
  }
  func.func @transform_4(%arg0: i32) -> (i32, i32) {
    %c0_i32 = arith.constant 0 : i32
    %c0_i32_0 = arith.constant 0 : i32
    %c0_i32_1 = arith.constant 0 : i32
    return %c0_i32, %c0_i32_0 : i32, i32
  }
  func.func @transform_5(%arg0: i32) -> (i32, i32) {
    %c0_i32 = arith.constant 0 : i32
    %c0_i32_0 = arith.constant 0 : i32
    %c0_i32_1 = arith.constant 0 : i32
    return %c0_i32, %c0_i32_0 : i32, i32
  }
  func.func @transform_6(%arg0: i32) -> (i32, i32) {
    %c0_i32 = arith.constant 0 : i32
    %c0_i32_0 = arith.constant 0 : i32
    %c0_i32_1 = arith.constant 0 : i32
    return %c0_i32, %c0_i32_0 : i32, i32
  }
  func.func @transform_7(%arg0: i32) -> (i32, i32) {
    %c0_i32 = arith.constant 0 : i32
    %c0_i32_0 = arith.constant 0 : i32
    %c0_i32_1 = arith.constant 0 : i32
    return %c0_i32, %c0_i32_0 : i32, i32
  }
  func.func @transform_8(%arg0: i32) -> (i32, i32) {
    %c0_i32 = arith.constant 0 : i32
    %c0_i32_0 = arith.constant 0 : i32
    %c0_i32_1 = arith.constant 0 : i32
    return %c0_i32, %c0_i32_0 : i32, i32
  }
  func.func @transform_9(%arg0: i32) -> (i32, i32) {
    %c0_i32 = arith.constant 0 : i32
    %c0_i32_0 = arith.constant 0 : i32
    return %arg0, %c0_i32 : i32, i32
  }
}

module attributes {stable_mosaic.version = 11 : i64} {
  func.func @generator_kernel(%arg0: i32, %arg1: memref<8x128xf32, #tpu.memory_space<vmem>>, %arg2: memref<128x128xbf16, #tpu.memory_space<vmem>>, %arg3: memref<1x128xf32, #tpu.memory_space<vmem>>, %arg4: memref<128x128xbf16, #tpu.memory_space<vmem>>, %arg5: memref<1x128xf32, #tpu.memory_space<vmem>>, %arg6: memref<1x128xf32, #tpu.memory_space<vmem>>, %arg7: memref<1x128xf32, #tpu.memory_space<vmem>>, %arg8: memref<128x128xbf16, #tpu.memory_space<vmem>>, %arg9: memref<1x128xf32, #tpu.memory_space<vmem>>, %arg10: memref<8x128xf32, #tpu.memory_space<vmem>>) attributes {dimension_semantics = [#tpu.dimension_semantics<parallel>], iteration_bounds = array<i64: 1>, scalar_prefetch = 0 : i64, scratch_operands = 0 : i64, tpu.core_type = #tpu.core_type<tc>, window_params = [{transform_indices = @transform_0, window_bounds = array<i64: 8, 128>}, {pipeline_mode = #tpu.pipeline_mode<synchronous>, transform_indices = @transform_1, window_bounds = array<i64: 128, 128>}, {pipeline_mode = #tpu.pipeline_mode<synchronous>, transform_indices = @transform_2, window_bounds = array<i64: 1, 128>}, {pipeline_mode = #tpu.pipeline_mode<synchronous>, transform_indices = @transform_3, window_bounds = array<i64: 128, 128>}, {pipeline_mode = #tpu.pipeline_mode<synchronous>, transform_indices = @transform_4, window_bounds = array<i64: 1, 128>}, {pipeline_mode = #tpu.pipeline_mode<synchronous>, transform_indices = @transform_5, window_bounds = array<i64: 1, 128>}, {pipeline_mode = #tpu.pipeline_mode<synchronous>, transform_indices = @transform_6, window_bounds = array<i64: 1, 128>}, {pipeline_mode = #tpu.pipeline_mode<synchronous>, transform_indices = @transform_7, window_bounds = array<i64: 128, 128>}, {pipeline_mode = #tpu.pipeline_mode<synchronous>, transform_indices = @transform_8, window_bounds = array<i64: 1, 128>}, {transform_indices = @transform_9, window_bounds = array<i64: 8, 128>}]} {
    %c0 = arith.constant 0 : index
    %c0_0 = arith.constant 0 : index
    %0 = vector.load %arg1[%c0, %c0_0] : memref<8x128xf32, #tpu.memory_space<vmem>>, vector<8x128xf32>
    %1 = arith.truncf %0 : vector<8x128xf32> to vector<8x128xbf16>
    %c0_1 = arith.constant 0 : index
    %c0_2 = arith.constant 0 : index
    %2 = vector.load %arg2[%c0_1, %c0_2] : memref<128x128xbf16, #tpu.memory_space<vmem>>, vector<128x128xbf16>
    %cst = arith.constant dense<0.000000e+00> : vector<8x128xf32>
    %3 = tpu.matmul %1, %2, %cst {dimension_numbers = #tpu.dot_dimension_numbers<[1], [0], [0], [1], [0, 0, 1, 1], [], []>} : vector<8x128xbf16>, vector<128x128xbf16>, vector<8x128xf32> -> vector<8x128xf32>
    %c0_3 = arith.constant 0 : index
    %c0_4 = arith.constant 0 : index
    %4 = vector.load %arg3[%c0_3, %c0_4] : memref<1x128xf32, #tpu.memory_space<vmem>>, vector<1x128xf32>
    %5 = vector.broadcast %4 : vector<1x128xf32> to vector<8x128xf32>
    %6 = arith.addf %3, %5 : vector<8x128xf32>
    %cst_5 = arith.constant 0.000000e+00 : f32
    %7 = vector.broadcast %cst_5 : f32 to vector<8x128xf32>
    %8 = arith.cmpf oge, %6, %7 : vector<8x128xf32>
    %cst_6 = arith.constant 0.00999999977 : f32
    %9 = vector.broadcast %cst_6 : f32 to vector<8x128xf32>
    %10 = arith.mulf %9, %6 : vector<8x128xf32>
    %11 = arith.select %8, %6, %10 : vector<8x128xi1>, vector<8x128xf32>
    %12 = arith.truncf %11 : vector<8x128xf32> to vector<8x128xbf16>
    %c0_7 = arith.constant 0 : index
    %c0_8 = arith.constant 0 : index
    %13 = vector.load %arg4[%c0_7, %c0_8] : memref<128x128xbf16, #tpu.memory_space<vmem>>, vector<128x128xbf16>
    %cst_9 = arith.constant dense<0.000000e+00> : vector<8x128xf32>
    %14 = tpu.matmul %12, %13, %cst_9 {dimension_numbers = #tpu.dot_dimension_numbers<[1], [0], [0], [1], [0, 0, 1, 1], [], []>} : vector<8x128xbf16>, vector<128x128xbf16>, vector<8x128xf32> -> vector<8x128xf32>
    %c0_10 = arith.constant 0 : index
    %c0_11 = arith.constant 0 : index
    %15 = vector.load %arg5[%c0_10, %c0_11] : memref<1x128xf32, #tpu.memory_space<vmem>>, vector<1x128xf32>
    %16 = vector.broadcast %15 : vector<1x128xf32> to vector<8x128xf32>
    %17 = arith.addf %14, %16 : vector<8x128xf32>
    %18 = arith.addf %17, %0 : vector<8x128xf32>
    %cst_12 = arith.constant dense<0.000000e+00> : vector<8xf32>
    %19 = vector.multi_reduction <add>, %18, %cst_12 [1] : vector<8x128xf32> to vector<8xf32>
    %20 = vector.shape_cast %19 : vector<8xf32> to vector<8x1xf32>
    %cst_13 = arith.constant 3.125000e-02 : f32
    %21 = vector.broadcast %cst_13 : f32 to vector<8x1xf32>
    %22 = arith.mulf %20, %21 : vector<8x1xf32>
    %23 = arith.mulf %18, %18 : vector<8x128xf32>
    %cst_14 = arith.constant dense<0.000000e+00> : vector<8xf32>
    %24 = vector.multi_reduction <add>, %23, %cst_14 [1] : vector<8x128xf32> to vector<8xf32>
    %25 = vector.shape_cast %24 : vector<8xf32> to vector<8x1xf32>
    %cst_15 = arith.constant 3.125000e-02 : f32
    %26 = vector.broadcast %cst_15 : f32 to vector<8x1xf32>
    %27 = arith.mulf %25, %26 : vector<8x1xf32>
    %28 = arith.mulf %22, %22 : vector<8x1xf32>
    %29 = arith.subf %27, %28 : vector<8x1xf32>
    %30 = vector.broadcast %22 : vector<8x1xf32> to vector<8x128xf32>
    %31 = arith.subf %18, %30 : vector<8x128xf32>
    %cst_16 = arith.constant 9.99999974E-6 : f32
    %32 = vector.broadcast %cst_16 : f32 to vector<8x1xf32>
    %33 = arith.addf %29, %32 : vector<8x1xf32>
    %34 = math.rsqrt %33 : vector<8x1xf32>
    %35 = vector.broadcast %34 : vector<8x1xf32> to vector<8x128xf32>
    %36 = arith.mulf %31, %35 : vector<8x128xf32>
    %c0_17 = arith.constant 0 : index
    %c0_18 = arith.constant 0 : index
    %37 = vector.load %arg6[%c0_17, %c0_18] : memref<1x128xf32, #tpu.memory_space<vmem>>, vector<1x128xf32>
    %38 = vector.broadcast %37 : vector<1x128xf32> to vector<8x128xf32>
    %39 = arith.mulf %36, %38 : vector<8x128xf32>
    %c0_19 = arith.constant 0 : index
    %c0_20 = arith.constant 0 : index
    %40 = vector.load %arg7[%c0_19, %c0_20] : memref<1x128xf32, #tpu.memory_space<vmem>>, vector<1x128xf32>
    %41 = vector.broadcast %40 : vector<1x128xf32> to vector<8x128xf32>
    %42 = arith.addf %39, %41 : vector<8x128xf32>
    %43 = arith.truncf %42 : vector<8x128xf32> to vector<8x128xbf16>
    %c0_21 = arith.constant 0 : index
    %c0_22 = arith.constant 0 : index
    %44 = vector.load %arg8[%c0_21, %c0_22] : memref<128x128xbf16, #tpu.memory_space<vmem>>, vector<128x128xbf16>
    %cst_23 = arith.constant dense<0.000000e+00> : vector<8x128xf32>
    %45 = tpu.matmul %43, %44, %cst_23 {dimension_numbers = #tpu.dot_dimension_numbers<[1], [0], [0], [1], [0, 0, 1, 1], [], []>} : vector<8x128xbf16>, vector<128x128xbf16>, vector<8x128xf32> -> vector<8x128xf32>
    %c0_24 = arith.constant 0 : index
    %c0_25 = arith.constant 0 : index
    %46 = vector.load %arg9[%c0_24, %c0_25] : memref<1x128xf32, #tpu.memory_space<vmem>>, vector<1x128xf32>
    %47 = vector.broadcast %46 : vector<1x128xf32> to vector<8x128xf32>
    %48 = arith.addf %45, %47 : vector<8x128xf32>
    %c0_26 = arith.constant 0 : index
    %c0_27 = arith.constant 0 : index
    %49 = vector.load %arg10[%c0_26, %c0_27] : memref<8x128xf32, #tpu.memory_space<vmem>>, vector<8x128xf32>
    tpu.vector_store %arg10[%c0_26, %c0_27], %48 {strides = array<i32>} : memref<8x128xf32, #tpu.memory_space<vmem>>, vector<8x128xf32>,
    return
  }
  func.func @transform_0(%arg0: i32) -> (i32, i32) {
    %c0_i32 = arith.constant 0 : i32
    %c0_i32_0 = arith.constant 0 : i32
    return %arg0, %c0_i32 : i32, i32
  }
  func.func @transform_1(%arg0: i32) -> (i32, i32) {
    %c0_i32 = arith.constant 0 : i32
    %c0_i32_0 = arith.constant 0 : i32
    %c0_i32_1 = arith.constant 0 : i32
    return %c0_i32, %c0_i32_0 : i32, i32
  }
  func.func @transform_2(%arg0: i32) -> (i32, i32) {
    %c0_i32 = arith.constant 0 : i32
    %c0_i32_0 = arith.constant 0 : i32
    %c0_i32_1 = arith.constant 0 : i32
    return %c0_i32, %c0_i32_0 : i32, i32
  }
  func.func @transform_3(%arg0: i32) -> (i32, i32) {
    %c0_i32 = arith.constant 0 : i32
    %c0_i32_0 = arith.constant 0 : i32
    %c0_i32_1 = arith.constant 0 : i32
    return %c0_i32, %c0_i32_0 : i32, i32
  }
  func.func @transform_4(%arg0: i32) -> (i32, i32) {
    %c0_i32 = arith.constant 0 : i32
    %c0_i32_0 = arith.constant 0 : i32
    %c0_i32_1 = arith.constant 0 : i32
    return %c0_i32, %c0_i32_0 : i32, i32
  }
  func.func @transform_5(%arg0: i32) -> (i32, i32) {
    %c0_i32 = arith.constant 0 : i32
    %c0_i32_0 = arith.constant 0 : i32
    %c0_i32_1 = arith.constant 0 : i32
    return %c0_i32, %c0_i32_0 : i32, i32
  }
  func.func @transform_6(%arg0: i32) -> (i32, i32) {
    %c0_i32 = arith.constant 0 : i32
    %c0_i32_0 = arith.constant 0 : i32
    %c0_i32_1 = arith.constant 0 : i32
    return %c0_i32, %c0_i32_0 : i32, i32
  }
  func.func @transform_7(%arg0: i32) -> (i32, i32) {
    %c0_i32 = arith.constant 0 : i32
    %c0_i32_0 = arith.constant 0 : i32
    %c0_i32_1 = arith.constant 0 : i32
    return %c0_i32, %c0_i32_0 : i32, i32
  }
  func.func @transform_8(%arg0: i32) -> (i32, i32) {
    %c0_i32 = arith.constant 0 : i32
    %c0_i32_0 = arith.constant 0 : i32
    %c0_i32_1 = arith.constant 0 : i32
    return %c0_i32, %c0_i32_0 : i32, i32
  }
  func.func @transform_9(%arg0: i32) -> (i32, i32) {
    %c0_i32 = arith.constant 0 : i32
    %c0_i32_0 = arith.constant 0 : i32
    return %arg0, %c0_i32 : i32, i32
  }
}

</mosaic_0001>

<llo_original>
// kernel: tpu_custom_call.1
$region0: #{tpu_custom_call.1}
  #allocation0 [shape = 'u32[]', space=smem, size = 0x4, offset = 0x4, fixed_abs, tag = 'smem constant byte address 0x4 - core index']
  #allocation1 [shape = 'u32[144,128]{1,0:T(1,128)}', space=vmem, size = 0x12000, scoped, tag = 'internal scratch']
  %s0 = inlined_call_operand.hbm [shape: f32[8,128], index: 0, kind: input, shape index: {}]
  %s1 = inlined_call_operand.hbm [shape: bf16[128,128], index: 1, kind: input, shape index: {}]
  %s2 = inlined_call_operand.vmem [shape: f32[1,128], index: 2, kind: input, shape index: {}]
  %s3 = inlined_call_operand.hbm [shape: bf16[128,128], index: 3, kind: input, shape index: {}]
  %s4 = inlined_call_operand.vmem [shape: f32[1,128], index: 4, kind: input, shape index: {}]
  %s5 = inlined_call_operand.vmem [shape: f32[1,128], index: 5, kind: input, shape index: {}]
  %s6 = inlined_call_operand.vmem [shape: f32[1,128], index: 6, kind: input, shape index: {}]
  %s7 = inlined_call_operand.hbm [shape: bf16[128,128], index: 7, kind: input, shape index: {}]
  %s8 = inlined_call_operand.vmem [shape: f32[1,128], index: 8, kind: input, shape index: {}]
  %s9 = inlined_call_operand.hbm [shape: f32[8,128], index: 9, kind: output, shape index: {}]
  %s10 = sld [smem:[#allocation0]]
  $region62: #{tpu_custom_call.1} parent=0
    _
  %s12 = ssub.s32 1, %s10
  %s13 = scalar_select 0, %s12, %s10
  $region1: #{tpu_custom_call.1} parent=0
    #allocation2 [shape = 'u8[4096]{0}', space=vmem, size = 0x1000, scoped, tag = 'input window, operand 0, single buffered']
    #allocation3 [shape = 's32[1]{0}', space=sflag, size = 0x4, scoped, tag = 'scoped memory for tpu_custom_call.1']
    #allocation4 [shape = 's32[1]{0}', space=sflag, size = 0x4, scoped, tag = 'scoped memory for tpu_custom_call.1']
    #allocation5 [shape = 'u8[32768]{0}', space=vmem, size = 0x8000, scoped, tag = 'input window, operand 1, single buffered']
    #allocation6 [shape = 's32[1]{0}', space=sflag, size = 0x4, scoped, tag = 'scoped memory for tpu_custom_call.1']
    #allocation7 [shape = 'u8[32768]{0}', space=vmem, size = 0x8000, scoped, tag = 'input window, operand 3, single buffered']
    #allocation8 [shape = 'u8[32768]{0}', space=vmem, size = 0x8000, scoped, tag = 'input window, operand 7, single buffered']
    #allocation9 [shape = 's32[1]{0}', space=sflag, size = 0x4, scoped, tag = 'scoped memory for tpu_custom_call.1']
    #allocation10 [shape = 'u8[4096]{0}', space=vmem, size = 0x1000, scoped, tag = 'output window, operand 0, single buffered']
    %14 = vsyncpa [#allocation3], 0
    %15 = vsyncpa [#allocation6], 0
    %16 = vsyncpa [#allocation9], 0
    %17 = vsyncpa [#allocation4], 0
    // Predicated region
    $region2: #{tpu_custom_call.1} parent=1 // pred_check
      _
    $region3: #{tpu_custom_call.1} parent=1 // pred_check_branch
      %19 = sbr.rel (0) target = $region5
    $region4: #{tpu_custom_call.1} parent=1 // pred_region
      %s21 = ssub.s32 128, 128
      %22 = vsyncadd [#allocation3], %s21
      %s24 = sshll.u32 [#allocation2], 4
      %s25 = int_to_ptr.vmem [resolvable:$true] %s24
      %27 = dma.hbm_to_vmem [thread:$0]  %s0, 128, %s25, [#allocation3]
    $region5: #{tpu_custom_call.1} parent=1 // pred_fallthru
      _
    // Predicated region
    $region6: #{tpu_custom_call.1} parent=1 // pred_check
      _
    $region7: #{tpu_custom_call.1} parent=1 // pred_check_branch
      %29 = sbr.rel (0) target = $region9
    $region8: #{tpu_custom_call.1} parent=1 // pred_region
      %s31 = ssub.s32 1024, 1024
      %32 = vsyncadd [#allocation6], %s31
      %s33 = sshll.u32 [#allocation5], 4
      %s34 = int_to_ptr.vmem [resolvable:$true] %s33
      %39 = dma.hbm_to_vmem [thread:$0]  %s1, 1024, %s34, [#allocation6], 64, 64, 4
    $region9: #{tpu_custom_call.1} parent=1 // pred_fallthru
      _
    // Predicated region
    $region10: #{tpu_custom_call.1} parent=1 // pred_check
      _
    $region11: #{tpu_custom_call.1} parent=1 // pred_check_branch
      %41 = sbr.rel (0) target = $region13
    $region12: #{tpu_custom_call.1} parent=1 // pred_region
      _
    $region13: #{tpu_custom_call.1} parent=1 // pred_fallthru
      _
    // Predicated region
    $region14: #{tpu_custom_call.1} parent=1 // pred_check
      _
    $region15: #{tpu_custom_call.1} parent=1 // pred_check_branch
      %43 = sbr.rel (0) target = $region17
    $region16: #{tpu_custom_call.1} parent=1 // pred_region
      %s45 = ssub.s32 1024, 1024
      %46 = vsyncadd [#allocation6], %s45
      %s47 = sshll.u32 [#allocation7], 4
      %s48 = int_to_ptr.vmem [resolvable:$true] %s47
      %53 = dma.hbm_to_vmem [thread:$0]  %s3, 1024, %s48, [#allocation6], 64, 64, 4
    $region17: #{tpu_custom_call.1} parent=1 // pred_fallthru
      _
    // Predicated region
    $region18: #{tpu_custom_call.1} parent=1 // pred_check
      _
    $region19: #{tpu_custom_call.1} parent=1 // pred_check_branch
      %55 = sbr.rel (0) target = $region21
    $region20: #{tpu_custom_call.1} parent=1 // pred_region
      _
    $region21: #{tpu_custom_call.1} parent=1 // pred_fallthru
      _
    // Predicated region
    $region22: #{tpu_custom_call.1} parent=1 // pred_check
      _
    $region23: #{tpu_custom_call.1} parent=1 // pred_check_branch
      %57 = sbr.rel (0) target = $region25
    $region24: #{tpu_custom_call.1} parent=1 // pred_region
      _
    $region25: #{tpu_custom_call.1} parent=1 // pred_fallthru
      _
    // Predicated region
    $region26: #{tpu_custom_call.1} parent=1 // pred_check
      _
    $region27: #{tpu_custom_call.1} parent=1 // pred_check_branch
      %59 = sbr.rel (0) target = $region29
    $region28: #{tpu_custom_call.1} parent=1 // pred_region
      _
    $region29: #{tpu_custom_call.1} parent=1 // pred_fallthru
      _
    // Predicated region
    $region30: #{tpu_custom_call.1} parent=1 // pred_check
      _
    $region31: #{tpu_custom_call.1} parent=1 // pred_check_branch
      %61 = sbr.rel (0) target = $region33
    $region32: #{tpu_custom_call.1} parent=1 // pred_region
      %s63 = ssub.s32 1024, 1024
      %64 = vsyncadd [#allocation9], %s63
      %s65 = sshll.u32 [#allocation8], 4
      %s66 = int_to_ptr.vmem [resolvable:$true] %s65
      %71 = dma.hbm_to_vmem [thread:$0]  %s7, 1024, %s66, [#allocation9], 64, 64, 4
    $region33: #{tpu_custom_call.1} parent=1 // pred_fallthru
      _
    // Predicated region
    $region34: #{tpu_custom_call.1} parent=1 // pred_check
      _
    $region35: #{tpu_custom_call.1} parent=1 // pred_check_branch
      %73 = sbr.rel (0) target = $region37
    $region36: #{tpu_custom_call.1} parent=1 // pred_region
      _
    $region37: #{tpu_custom_call.1} parent=1 // pred_fallthru
      _
    // Predicated region
    $region38: #{tpu_custom_call.1} parent=1 // pred_check
      _
    $region39: #{tpu_custom_call.1} parent=1 // pred_check_branch
      %75 = sbr.rel (0) target = $region41
    $region40: #{tpu_custom_call.1} parent=1 // pred_region
      %76 = dma.done [#allocation3], 128
    $region41: #{tpu_custom_call.1} parent=1 // pred_fallthru
      _
    // Predicated region
    $region42: #{tpu_custom_call.1} parent=1 // pred_check
      _
    $region43: #{tpu_custom_call.1} parent=1 // pred_check_branch
      %78 = sbr.rel (0) target = $region45
    $region44: #{tpu_custom_call.1} parent=1 // pred_region
      %79 = dma.done [#allocation6], 1024
    $region45: #{tpu_custom_call.1} parent=1 // pred_fallthru
      _
    // Predicated region
    $region46: #{tpu_custom_call.1} parent=1 // pred_check
      _
    $region47: #{tpu_custom_call.1} parent=1 // pred_check_branch
      %81 = sbr.rel (0) target = $region49
    $region48: #{tpu_custom_call.1} parent=1 // pred_region
      %82 = dma.done [#allocation6], 1024
    $region49: #{tpu_custom_call.1} parent=1 // pred_fallthru
      _
    // Predicated region
    $region50: #{tpu_custom_call.1} parent=1 // pred_check
      _
    $region51: #{tpu_custom_call.1} parent=1 // pred_check_branch
      %84 = sbr.rel (0) target = $region53
    $region52: #{tpu_custom_call.1} parent=1 // pred_region
      %85 = dma.done [#allocation9], 1024
    $region53: #{tpu_custom_call.1} parent=1 // pred_fallthru
      _
    %v87 = vld [vmem:[#allocation2] sm:$0xff]
    %v88 = vpack.c.bf16 %v87, %v87
    %v89 = vld [vmem:[#allocation5] sm:$0xf]
    %v90 = vld [vmem:[#allocation5 + $0x4] sm:$0xf]
    %v91 = vld [vmem:[#allocation5 + $0x8] sm:$0xf]
    %v92 = vld [vmem:[#allocation5 + $0xc] sm:$0xf]
    %v93 = vld [vmem:[#allocation5 + $0x10] sm:$0xf]
    %v94 = vld [vmem:[#allocation5 + $0x14] sm:$0xf]
    %v95 = vld [vmem:[#allocation5 + $0x18] sm:$0xf]
    %v96 = vld [vmem:[#allocation5 + $0x1c] sm:$0xf]
    %v97 = vld [vmem:[#allocation5 + $0x20] sm:$0xf]
    %v98 = vld [vmem:[#allocation5 + $0x24] sm:$0xf]
    %v99 = vld [vmem:[#allocation5 + $0x28] sm:$0xf]
    %v100 = vld [vmem:[#allocation5 + $0x2c] sm:$0xf]
    %v101 = vld [vmem:[#allocation5 + $0x30] sm:$0xf]
    %v102 = vld [vmem:[#allocation5 + $0x34] sm:$0xf]
    %v103 = vld [vmem:[#allocation5 + $0x38] sm:$0xf]
    %v104 = vld [vmem:[#allocation5 + $0x3c] sm:$0xf]
    %v105 = vld [vmem:[%s2] sm:$0x1]
    %v107 = vlaneseq
    %v108 = vshrl.u32 %v107, 7
    %v109 = vsub.s32 0, %v108
    %v110 = vrot.slane %v105, %v109
    %v128 = vunpack.c.l.b16 %v89
    %v129 = vunpack.c.l.b16 %v90
    %v130 = vunpack.c.l.b16 %v91
    %v131 = vunpack.c.l.b16 %v92
    %v132 = vunpack.c.l.b16 %v93
    %v133 = vunpack.c.l.b16 %v94
    %v134 = vunpack.c.l.b16 %v95
    %v135 = vunpack.c.l.b16 %v96
    %v136 = vunpack.c.l.b16 %v97
    %v137 = vunpack.c.l.b16 %v98
    %v138 = vunpack.c.l.b16 %v99
    %v139 = vunpack.c.l.b16 %v100
    %v140 = vunpack.c.l.b16 %v101
    %v141 = vunpack.c.l.b16 %v102
    %v142 = vunpack.c.l.b16 %v103
    %v143 = vunpack.c.l.b16 %v104
    %v144 = vpack.c.b16 %v129, %v128
    %v145 = vpack.c.b16 %v131, %v130
    %v146 = vpack.c.b16 %v133, %v132
    %v147 = vpack.c.b16 %v135, %v134
    %v148 = vpack.c.b16 %v137, %v136
    %v149 = vpack.c.b16 %v139, %v138
    %v150 = vpack.c.b16 %v141, %v140
    %v151 = vpack.c.b16 %v143, %v142
    %160 = vmatprep.subr.bf16.mxu0 0
    %161 = vmatpush1.bf16.msra.mxu0 %v144
    %162 = vmatprep.subr.bf16.mxu0 0
    %163 = vmatpush1.bf16.msra.mxu0 %v145
    %164 = vmatprep.subr.bf16.mxu0 0
    %165 = vmatpush1.bf16.msra.mxu0 %v146
    %166 = vmatprep.subr.bf16.mxu0 0
    %167 = vmatpush1.bf16.msra.mxu0 %v147
    %168 = vmatprep.subr.bf16.mxu0 0
    %169 = vmatpush1.bf16.msra.mxu0 %v148
    %170 = vmatprep.subr.bf16.mxu0 0
    %171 = vmatpush1.bf16.msra.mxu0 %v149
    %172 = vmatprep.subr.bf16.mxu0 0
    %173 = vmatpush1.bf16.msra.mxu0 %v150
    %174 = vmatprep.subr.bf16.mxu0 0
    %175 = vmatpush1.bf16.msra.mxu0 %v151
    %176 = vmatprep.subr.bf16.mxu0 0
    %177 = vmatpush1.bf16.msra.mxu0 0
    %178 = vmatprep.subr.bf16.mxu0 0
    %179 = vmatpush1.bf16.msra.mxu0 0
    %180 = vmatprep.subr.bf16.mxu0 0
    %181 = vmatpush1.bf16.msra.mxu0 0
    %182 = vmatprep.subr.bf16.mxu0 0
    %183 = vmatpush1.bf16.msra.mxu0 0
    %184 = vmatprep.subr.bf16.mxu0 0
    %185 = vmatpush1.bf16.msra.mxu0 0
    %186 = vmatprep.subr.bf16.mxu0 0
    %187 = vmatpush1.bf16.msra.mxu0 0
    %188 = vmatprep.subr.bf16.mxu0 0
    %189 = vmatpush1.bf16.msra.mxu0 0
    %190 = vmatprep.subr.bf16.mxu0 0
    %191 = vmatpush1.bf16.msra.mxu0 0
    %192 = vmatprep.mubr.bf16.mxu0 0
    %193 = vmatmul.mubr.bf16.gmra.mrb[0].mxu0 %v88
    %v194 = vpop.f32.mrb[0].mxu0
    %v195 = vadd.f32 %v110, %v194
    %v196 = vpop.f32.mrb[0].mxu0
    %v197 = vpop.f32.mrb[0].mxu0
    %v198 = vpop.f32.mrb[0].mxu0
    %199 = vdwg.mxu0
    %vm200 = vcmp.ge.f32.partialorder %v195, 0.0
    %v201 = vmul.f32 %v195, 0.01
    %v202 = vsel %vm200, %v195, %v201
    %v203 = vpack.c.bf16 %v202, %v202
    %v204 = vld [vmem:[#allocation7] sm:$0xf]
    %v205 = vld [vmem:[#allocation7 + $0x4] sm:$0xf]
    %v206 = vld [vmem:[#allocation7 + $0x8] sm:$0xf]
    %v207 = vld [vmem:[#allocation7 + $0xc] sm:$0xf]
    %v208 = vld [vmem:[#allocation7 + $0x10] sm:$0xf]
    %v209 = vld [vmem:[#allocation7 + $0x14] sm:$0xf]
    %v210 = vld [vmem:[#allocation7 + $0x18] sm:$0xf]
    %v211 = vld [vmem:[#allocation7 + $0x1c] sm:$0xf]
    %v212 = vld [vmem:[#allocation7 + $0x20] sm:$0xf]
    %v213 = vld [vmem:[#allocation7 + $0x24] sm:$0xf]
    %v214 = vld [vmem:[#allocation7 + $0x28] sm:$0xf]
    %v215 = vld [vmem:[#allocation7 + $0x2c] sm:$0xf]
    %v216 = vld [vmem:[#allocation7 + $0x30] sm:$0xf]
    %v217 = vld [vmem:[#allocation7 + $0x34] sm:$0xf]
    %v218 = vld [vmem:[#allocation7 + $0x38] sm:$0xf]
    %v219 = vld [vmem:[#allocation7 + $0x3c] sm:$0xf]
    %v220 = vld [vmem:[%s4] sm:$0x1]
    %v222 = vlaneseq
    %v223 = vshrl.u32 %v222, 7
    %v224 = vsub.s32 0, %v223
    %v225 = vrot.slane %v220, %v224
    %v243 = vunpack.c.l.b16 %v204
    %v244 = vunpack.c.l.b16 %v205
    %v245 = vunpack.c.l.b16 %v206
    %v246 = vunpack.c.l.b16 %v207
    %v247 = vunpack.c.l.b16 %v208
    %v248 = vunpack.c.l.b16 %v209
    %v249 = vunpack.c.l.b16 %v210
    %v250 = vunpack.c.l.b16 %v211
    %v251 = vunpack.c.l.b16 %v212
    %v252 = vunpack.c.l.b16 %v213
    %v253 = vunpack.c.l.b16 %v214
    %v254 = vunpack.c.l.b16 %v215
    %v255 = vunpack.c.l.b16 %v216
    %v256 = vunpack.c.l.b16 %v217
    %v257 = vunpack.c.l.b16 %v218
    %v258 = vunpack.c.l.b16 %v219
    %v259 = vpack.c.b16 %v244, %v243
    %v260 = vpack.c.b16 %v246, %v245
    %v261 = vpack.c.b16 %v248, %v247
    %v262 = vpack.c.b16 %v250, %v249
    %v263 = vpack.c.b16 %v252, %v251
    %v264 = vpack.c.b16 %v254, %v253
    %v265 = vpack.c.b16 %v256, %v255
    %v266 = vpack.c.b16 %v258, %v257
    %275 = vmatprep.subr.bf16.mxu0 0
    %276 = vmatpush1.bf16.msra.mxu0 %v259
    %277 = vmatprep.subr.bf16.mxu0 0
    %278 = vmatpush1.bf16.msra.mxu0 %v260
    %279 = vmatprep.subr.bf16.mxu0 0
    %280 = vmatpush1.bf16.msra.mxu0 %v261
    %281 = vmatprep.subr.bf16.mxu0 0
    %282 = vmatpush1.bf16.msra.mxu0 %v262
    %283 = vmatprep.subr.bf16.mxu0 0
    %284 = vmatpush1.bf16.msra.mxu0 %v263
    %285 = vmatprep.subr.bf16.mxu0 0
    %286 = vmatpush1.bf16.msra.mxu0 %v264
    %287 = vmatprep.subr.bf16.mxu0 0
    %288 = vmatpush1.bf16.msra.mxu0 %v265
    %289 = vmatprep.subr.bf16.mxu0 0
    %290 = vmatpush1.bf16.msra.mxu0 %v266
    %291 = vmatprep.subr.bf16.mxu0 0
    %292 = vmatpush1.bf16.msra.mxu0 0
    %293 = vmatprep.subr.bf16.mxu0 0
    %294 = vmatpush1.bf16.msra.mxu0 0
    %295 = vmatprep.subr.bf16.mxu0 0
    %296 = vmatpush1.bf16.msra.mxu0 0
    %297 = vmatprep.subr.bf16.mxu0 0
    %298 = vmatpush1.bf16.msra.mxu0 0
    %299 = vmatprep.subr.bf16.mxu0 0
    %300 = vmatpush1.bf16.msra.mxu0 0
    %301 = vmatprep.subr.bf16.mxu0 0
    %302 = vmatpush1.bf16.msra.mxu0 0
    %303 = vmatprep.subr.bf16.mxu0 0
    %304 = vmatpush1.bf16.msra.mxu0 0
    %305 = vmatprep.subr.bf16.mxu0 0
    %306 = vmatpush1.bf16.msra.mxu0 0
    %307 = vmatprep.mubr.bf16.mxu0 0
    %308 = vmatmul.mubr.bf16.gmra.mrb[0].mxu0 %v203
    %v309 = vpop.f32.mrb[0].mxu0
    %v310 = vadd.f32 %v225, %v309
    %v311 = vpop.f32.mrb[0].mxu0
    %v312 = vpop.f32.mrb[0].mxu0
    %v313 = vpop.f32.mrb[0].mxu0
    %314 = vdwg.mxu0
    %v315 = vadd.f32 %v310, %v87
    %316 = vadd.xlane.f32.xlu0 %v315
    %v317 = vpop.xlane.xlu0 %316
    %v318 = vmul.f32 %v317, 0.03125
    %v319 = vmul.f32 %v315, %v315
    %320 = vadd.xlane.f32.xlu0 %v319
    %v321 = vpop.xlane.xlu0 %320
    %v322 = vmul.f32 %v321, 0.03125
    %v323 = vmul.f32 %v318, %v318
    %v324 = vsub.f32 %v322, %v323
    %v325 = vsub.f32 %v315, %v318
    %v326 = vadd.f32 %v324, 1e-05
    %v327 = vrsqrt.pop %v326
    %v328 = vmul.f32 %v325, %v327
    %v329 = vld [vmem:[%s5] sm:$0x1]
    %v331 = vlaneseq
    %v332 = vshrl.u32 %v331, 7
    %v333 = vsub.s32 0, %v332
    %v334 = vrot.slane %v329, %v333
    %v336 = vmul.f32 %v328, %v334
    %v337 = vld [vmem:[%s6] sm:$0x1]
    %v339 = vlaneseq
    %v340 = vshrl.u32 %v339, 7
    %v341 = vsub.s32 0, %v340
    %v342 = vrot.slane %v337, %v341
    %v344 = vadd.f32 %v336, %v342
    %v345 = vpack.c.bf16 %v344, %v344
    %v346 = vld [vmem:[#allocation8] sm:$0xf]
    %v347 = vld [vmem:[#allocation8 + $0x4] sm:$0xf]
    %v348 = vld [vmem:[#allocation8 + $0x8] sm:$0xf]
    %v349 = vld [vmem:[#allocation8 + $0xc] sm:$0xf]
    %v350 = vld [vmem:[#allocation8 + $0x10] sm:$0xf]
    %v351 = vld [vmem:[#allocation8 + $0x14] sm:$0xf]
    %v352 = vld [vmem:[#allocation8 + $0x18] sm:$0xf]
    %v353 = vld [vmem:[#allocation8 + $0x1c] sm:$0xf]
    %v354 = vld [vmem:[#allocation8 + $0x20] sm:$0xf]
    %v355 = vld [vmem:[#allocation8 + $0x24] sm:$0xf]
    %v356 = vld [vmem:[#allocation8 + $0x28] sm:$0xf]
    %v357 = vld [vmem:[#allocation8 + $0x2c] sm:$0xf]
    %v358 = vld [vmem:[#allocation8 + $0x30] sm:$0xf]
    %v359 = vld [vmem:[#allocation8 + $0x34] sm:$0xf]
    %v360 = vld [vmem:[#allocation8 + $0x38] sm:$0xf]
    %v361 = vld [vmem:[#allocation8 + $0x3c] sm:$0xf]
    %v362 = vld [vmem:[%s8] sm:$0x1]
    %v364 = vlaneseq
    %v365 = vshrl.u32 %v364, 7
    %v366 = vsub.s32 0, %v365
    %v367 = vrot.slane %v362, %v366
    %v385 = vunpack.c.l.b16 %v346
    %v386 = vunpack.c.l.b16 %v347
    %v387 = vunpack.c.l.b16 %v348
    %v388 = vunpack.c.l.b16 %v349
    %v389 = vunpack.c.l.b16 %v350
    %v390 = vunpack.c.l.b16 %v351
    %v391 = vunpack.c.l.b16 %v352
    %v392 = vunpack.c.l.b16 %v353
    %v393 = vunpack.c.l.b16 %v354
    %v394 = vunpack.c.l.b16 %v355
    %v395 = vunpack.c.l.b16 %v356
    %v396 = vunpack.c.l.b16 %v357
    %v397 = vunpack.c.l.b16 %v358
    %v398 = vunpack.c.l.b16 %v359
    %v399 = vunpack.c.l.b16 %v360
    %v400 = vunpack.c.l.b16 %v361
    %v401 = vpack.c.b16 %v386, %v385
    %v402 = vpack.c.b16 %v388, %v387
    %v403 = vpack.c.b16 %v390, %v389
    %v404 = vpack.c.b16 %v392, %v391
    %v405 = vpack.c.b16 %v394, %v393
    %v406 = vpack.c.b16 %v396, %v395
    %v407 = vpack.c.b16 %v398, %v397
    %v408 = vpack.c.b16 %v400, %v399
    %417 = vmatprep.subr.bf16.mxu0 0
    %418 = vmatpush1.bf16.msra.mxu0 %v401
    %419 = vmatprep.subr.bf16.mxu0 0
    %420 = vmatpush1.bf16.msra.mxu0 %v402
    %421 = vmatprep.subr.bf16.mxu0 0
    %422 = vmatpush1.bf16.msra.mxu0 %v403
    %423 = vmatprep.subr.bf16.mxu0 0
    %424 = vmatpush1.bf16.msra.mxu0 %v404
    %425 = vmatprep.subr.bf16.mxu0 0
    %426 = vmatpush1.bf16.msra.mxu0 %v405
    %427 = vmatprep.subr.bf16.mxu0 0
    %428 = vmatpush1.bf16.msra.mxu0 %v406
    %429 = vmatprep.subr.bf16.mxu0 0
    %430 = vmatpush1.bf16.msra.mxu0 %v407
    %431 = vmatprep.subr.bf16.mxu0 0
    %432 = vmatpush1.bf16.msra.mxu0 %v408
    %433 = vmatprep.subr.bf16.mxu0 0
    %434 = vmatpush1.bf16.msra.mxu0 0
    %435 = vmatprep.subr.bf16.mxu0 0
    %436 = vmatpush1.bf16.msra.mxu0 0
    %437 = vmatprep.subr.bf16.mxu0 0
    %438 = vmatpush1.bf16.msra.mxu0 0
    %439 = vmatprep.subr.bf16.mxu0 0
    %440 = vmatpush1.bf16.msra.mxu0 0
    %441 = vmatprep.subr.bf16.mxu0 0
    %442 = vmatpush1.bf16.msra.mxu0 0
    %443 = vmatprep.subr.bf16.mxu0 0
    %444 = vmatpush1.bf16.msra.mxu0 0
    %445 = vmatprep.subr.bf16.mxu0 0
    %446 = vmatpush1.bf16.msra.mxu0 0
    %447 = vmatprep.subr.bf16.mxu0 0
    %448 = vmatpush1.bf16.msra.mxu0 0
    %449 = vmatprep.mubr.bf16.mxu0 0
    %450 = vmatmul.mubr.bf16.gmra.mrb[0].mxu0 %v345
    %v451 = vpop.f32.mrb[0].mxu0
    %v452 = vadd.f32 %v367, %v451
    %v453 = vpop.f32.mrb[0].mxu0
    %v454 = vpop.f32.mrb[0].mxu0
    %v455 = vpop.f32.mrb[0].mxu0
    %456 = vdwg.mxu0
    %457 = vst [vmem:[#allocation10] sm:$0xff] %v452
    // Predicated region
    $region54: #{tpu_custom_call.1} parent=1 // pred_check
      _
    $region55: #{tpu_custom_call.1} parent=1 // pred_check_branch
      %459 = sbr.rel (0) target = $region57
    $region56: #{tpu_custom_call.1} parent=1 // pred_region
      %s461 = ssub.s32 128, 128
      %462 = vsyncadd [#allocation4], %s461
      %s464 = sshll.u32 [#allocation10], 4
      %s465 = int_to_ptr.vmem [resolvable:$true] %s464
      %467 = dma.vmem_to_hbm [thread:$0]  %s465, 128, %s9, [#allocation4]
    $region57: #{tpu_custom_call.1} parent=1 // pred_fallthru
      _
    // Predicated region
    $region58: #{tpu_custom_call.1} parent=1 // pred_check
      _
    $region59: #{tpu_custom_call.1} parent=1 // pred_check_branch
      %469 = sbr.rel (0) target = $region61
    $region60: #{tpu_custom_call.1} parent=1 // pred_region
      %470 = dma.done [#allocation4], 128
    $region61: #{tpu_custom_call.1} parent=1 // pred_fallthru
      _
    %471 = vsyncpa [#allocation3], 1
    %472 = vsyncpa [#allocation6], 1
    %473 = vsyncpa [#allocation9], 1
    %474 = vsyncpa [#allocation4], 1

// kernel: tpu_custom_call.1
$region0: #{tpu_custom_call.1}
  #allocation0 [shape = 'u32[]', space=smem, size = 0x4, offset = 0x4, fixed_abs, tag = 'smem constant byte address 0x4 - core index']
  #allocation1 [shape = 'u32[144,128]{1,0:T(1,128)}', space=vmem, size = 0x12000, scoped, tag = 'internal scratch']
  %s0 = inlined_call_operand.hbm [shape: f32[8,128], index: 0, kind: input, shape index: {}]
  %s1 = inlined_call_operand.hbm [shape: bf16[128,128], index: 1, kind: input, shape index: {}]
  %s2 = inlined_call_operand.vmem [shape: f32[1,128], index: 2, kind: input, shape index: {}]
  %s3 = inlined_call_operand.hbm [shape: bf16[128,128], index: 3, kind: input, shape index: {}]
  %s4 = inlined_call_operand.vmem [shape: f32[1,128], index: 4, kind: input, shape index: {}]
  %s5 = inlined_call_operand.vmem [shape: f32[1,128], index: 5, kind: input, shape index: {}]
  %s6 = inlined_call_operand.vmem [shape: f32[1,128], index: 6, kind: input, shape index: {}]
  %s7 = inlined_call_operand.hbm [shape: bf16[128,128], index: 7, kind: input, shape index: {}]
  %s8 = inlined_call_operand.vmem [shape: f32[1,128], index: 8, kind: input, shape index: {}]
  %s9 = inlined_call_operand.hbm [shape: f32[8,128], index: 9, kind: output, shape index: {}]
  %s10 = sld [smem:[#allocation0]]
  $region62: #{tpu_custom_call.1} parent=0
    _
  %s12 = ssub.s32 1, %s10
  %s13 = scalar_select 0, %s12, %s10
  $region1: #{tpu_custom_call.1} parent=0
    #allocation2 [shape = 'u8[4096]{0}', space=vmem, size = 0x1000, scoped, tag = 'input window, operand 0, single buffered']
    #allocation3 [shape = 's32[1]{0}', space=sflag, size = 0x4, scoped, tag = 'scoped memory for tpu_custom_call.1']
    #allocation4 [shape = 's32[1]{0}', space=sflag, size = 0x4, scoped, tag = 'scoped memory for tpu_custom_call.1']
    #allocation5 [shape = 'u8[32768]{0}', space=vmem, size = 0x8000, scoped, tag = 'input window, operand 1, single buffered']
    #allocation6 [shape = 's32[1]{0}', space=sflag, size = 0x4, scoped, tag = 'scoped memory for tpu_custom_call.1']
    #allocation7 [shape = 'u8[32768]{0}', space=vmem, size = 0x8000, scoped, tag = 'input window, operand 3, single buffered']
    #allocation8 [shape = 'u8[32768]{0}', space=vmem, size = 0x8000, scoped, tag = 'input window, operand 7, single buffered']
    #allocation9 [shape = 's32[1]{0}', space=sflag, size = 0x4, scoped, tag = 'scoped memory for tpu_custom_call.1']
    #allocation10 [shape = 'u8[4096]{0}', space=vmem, size = 0x1000, scoped, tag = 'output window, operand 0, single buffered']
    %14 = vsyncpa [#allocation3], 0
    %15 = vsyncpa [#allocation6], 0
    %16 = vsyncpa [#allocation9], 0
    %17 = vsyncpa [#allocation4], 0
    // Predicated region
    $region2: #{tpu_custom_call.1} parent=1 // pred_check
      _
    $region3: #{tpu_custom_call.1} parent=1 // pred_check_branch
      %19 = sbr.rel (0) target = $region5
    $region4: #{tpu_custom_call.1} parent=1 // pred_region
      %s21 = ssub.s32 128, 128
      %22 = vsyncadd [#allocation3], %s21
      %s24 = sshll.u32 [#allocation2], 4
      %s25 = int_to_ptr.vmem [resolvable:$true] %s24
      %27 = dma.hbm_to_vmem [thread:$0]  %s0, 128, %s25, [#allocation3]
    $region5: #{tpu_custom_call.1} parent=1 // pred_fallthru
      _
    // Predicated region
    $region6: #{tpu_custom_call.1} parent=1 // pred_check
      _
    $region7: #{tpu_custom_call.1} parent=1 // pred_check_branch
      %29 = sbr.rel (0) target = $region9
    $region8: #{tpu_custom_call.1} parent=1 // pred_region
      %s31 = ssub.s32 1024, 1024
      %32 = vsyncadd [#allocation6], %s31
      %s33 = sshll.u32 [#allocation5], 4
      %s34 = int_to_ptr.vmem [resolvable:$true] %s33
      %39 = dma.hbm_to_vmem [thread:$0]  %s1, 1024, %s34, [#allocation6], 64, 64, 4
    $region9: #{tpu_custom_call.1} parent=1 // pred_fallthru
      _
    // Predicated region
    $region10: #{tpu_custom_call.1} parent=1 // pred_check
      _
    $region11: #{tpu_custom_call.1} parent=1 // pred_check_branch
      %41 = sbr.rel (0) target = $region13
    $region12: #{tpu_custom_call.1} parent=1 // pred_region
      _
    $region13: #{tpu_custom_call.1} parent=1 // pred_fallthru
      _
    // Predicated region
    $region14: #{tpu_custom_call.1} parent=1 // pred_check
      _
    $region15: #{tpu_custom_call.1} parent=1 // pred_check_branch
      %43 = sbr.rel (0) target = $region17
    $region16: #{tpu_custom_call.1} parent=1 // pred_region
      %s45 = ssub.s32 1024, 1024
      %46 = vsyncadd [#allocation6], %s45
      %s47 = sshll.u32 [#allocation7], 4
      %s48 = int_to_ptr.vmem [resolvable:$true] %s47
      %53 = dma.hbm_to_vmem [thread:$0]  %s3, 1024, %s48, [#allocation6], 64, 64, 4
    $region17: #{tpu_custom_call.1} parent=1 // pred_fallthru
      _
    // Predicated region
    $region18: #{tpu_custom_call.1} parent=1 // pred_check
      _
    $region19: #{tpu_custom_call.1} parent=1 // pred_check_branch
      %55 = sbr.rel (0) target = $region21
    $region20: #{tpu_custom_call.1} parent=1 // pred_region
      _
    $region21: #{tpu_custom_call.1} parent=1 // pred_fallthru
      _
    // Predicated region
    $region22: #{tpu_custom_call.1} parent=1 // pred_check
      _
    $region23: #{tpu_custom_call.1} parent=1 // pred_check_branch
      %57 = sbr.rel (0) target = $region25
    $region24: #{tpu_custom_call.1} parent=1 // pred_region
      _
    $region25: #{tpu_custom_call.1} parent=1 // pred_fallthru
      _
    // Predicated region
    $region26: #{tpu_custom_call.1} parent=1 // pred_check
      _
    $region27: #{tpu_custom_call.1} parent=1 // pred_check_branch
      %59 = sbr.rel (0) target = $region29
    $region28: #{tpu_custom_call.1} parent=1 // pred_region
      _
    $region29: #{tpu_custom_call.1} parent=1 // pred_fallthru
      _
    // Predicated region
    $region30: #{tpu_custom_call.1} parent=1 // pred_check
      _
    $region31: #{tpu_custom_call.1} parent=1 // pred_check_branch
      %61 = sbr.rel (0) target = $region33
    $region32: #{tpu_custom_call.1} parent=1 // pred_region
      %s63 = ssub.s32 1024, 1024
      %64 = vsyncadd [#allocation9], %s63
      %s65 = sshll.u32 [#allocation8], 4
      %s66 = int_to_ptr.vmem [resolvable:$true] %s65
      %71 = dma.hbm_to_vmem [thread:$0]  %s7, 1024, %s66, [#allocation9], 64, 64, 4
    $region33: #{tpu_custom_call.1} parent=1 // pred_fallthru
      _
    // Predicated region
    $region34: #{tpu_custom_call.1} parent=1 // pred_check
      _
    $region35: #{tpu_custom_call.1} parent=1 // pred_check_branch
      %73 = sbr.rel (0) target = $region37
    $region36: #{tpu_custom_call.1} parent=1 // pred_region
      _
    $region37: #{tpu_custom_call.1} parent=1 // pred_fallthru
      _
    // Predicated region
    $region38: #{tpu_custom_call.1} parent=1 // pred_check
      _
    $region39: #{tpu_custom_call.1} parent=1 // pred_check_branch
      %75 = sbr.rel (0) target = $region41
    $region40: #{tpu_custom_call.1} parent=1 // pred_region
      %76 = dma.done [#allocation3], 128
    $region41: #{tpu_custom_call.1} parent=1 // pred_fallthru
      _
    // Predicated region
    $region42: #{tpu_custom_call.1} parent=1 // pred_check
      _
    $region43: #{tpu_custom_call.1} parent=1 // pred_check_branch
      %78 = sbr.rel (0) target = $region45
    $region44: #{tpu_custom_call.1} parent=1 // pred_region
      %79 = dma.done [#allocation6], 1024
    $region45: #{tpu_custom_call.1} parent=1 // pred_fallthru
      _
    // Predicated region
    $region46: #{tpu_custom_call.1} parent=1 // pred_check
      _
    $region47: #{tpu_custom_call.1} parent=1 // pred_check_branch
      %81 = sbr.rel (0) target = $region49
    $region48: #{tpu_custom_call.1} parent=1 // pred_region
      %82 = dma.done [#allocation6], 1024
    $region49: #{tpu_custom_call.1} parent=1 // pred_fallthru
      _
    // Predicated region
    $region50: #{tpu_custom_call.1} parent=1 // pred_check
      _
    $region51: #{tpu_custom_call.1} parent=1 // pred_check_branch
      %84 = sbr.rel (0) target = $region53
    $region52: #{tpu_custom_call.1} parent=1 // pred_region
      %85 = dma.done [#allocation9], 1024
    $region53: #{tpu_custom_call.1} parent=1 // pred_fallthru
      _
    %v87 = vld [vmem:[#allocation2] sm:$0xff]
    %v88 = vpack.c.bf16 %v87, %v87
    %v89 = vld [vmem:[#allocation5] sm:$0xf]
    %v90 = vld [vmem:[#allocation5 + $0x4] sm:$0xf]
    %v91 = vld [vmem:[#allocation5 + $0x8] sm:$0xf]
    %v92 = vld [vmem:[#allocation5 + $0xc] sm:$0xf]
    %v93 = vld [vmem:[#allocation5 + $0x10] sm:$0xf]
    %v94 = vld [vmem:[#allocation5 + $0x14] sm:$0xf]
    %v95 = vld [vmem:[#allocation5 + $0x18] sm:$0xf]
    %v96 = vld [vmem:[#allocation5 + $0x1c] sm:$0xf]
    %v97 = vld [vmem:[#allocation5 + $0x20] sm:$0xf]
    %v98 = vld [vmem:[#allocation5 + $0x24] sm:$0xf]
    %v99 = vld [vmem:[#allocation5 + $0x28] sm:$0xf]
    %v100 = vld [vmem:[#allocation5 + $0x2c] sm:$0xf]
    %v101 = vld [vmem:[#allocation5 + $0x30] sm:$0xf]
    %v102 = vld [vmem:[#allocation5 + $0x34] sm:$0xf]
    %v103 = vld [vmem:[#allocation5 + $0x38] sm:$0xf]
    %v104 = vld [vmem:[#allocation5 + $0x3c] sm:$0xf]
    %v105 = vld [vmem:[%s2] sm:$0x1]
    %v107 = vlaneseq
    %v108 = vshrl.u32 %v107, 7
    %v109 = vsub.s32 0, %v108
    %v110 = vrot.slane %v105, %v109
    %v128 = vunpack.c.l.b16 %v89
    %v129 = vunpack.c.l.b16 %v90
    %v130 = vunpack.c.l.b16 %v91
    %v131 = vunpack.c.l.b16 %v92
    %v132 = vunpack.c.l.b16 %v93
    %v133 = vunpack.c.l.b16 %v94
    %v134 = vunpack.c.l.b16 %v95
    %v135 = vunpack.c.l.b16 %v96
    %v136 = vunpack.c.l.b16 %v97
    %v137 = vunpack.c.l.b16 %v98
    %v138 = vunpack.c.l.b16 %v99
    %v139 = vunpack.c.l.b16 %v100
    %v140 = vunpack.c.l.b16 %v101
    %v141 = vunpack.c.l.b16 %v102
    %v142 = vunpack.c.l.b16 %v103
    %v143 = vunpack.c.l.b16 %v104
    %v144 = vpack.c.b16 %v129, %v128
    %v145 = vpack.c.b16 %v131, %v130
    %v146 = vpack.c.b16 %v133, %v132
    %v147 = vpack.c.b16 %v135, %v134
    %v148 = vpack.c.b16 %v137, %v136
    %v149 = vpack.c.b16 %v139, %v138
    %v150 = vpack.c.b16 %v141, %v140
    %v151 = vpack.c.b16 %v143, %v142
    %160 = vmatprep.subr.bf16.mxu0 0
    %161 = vmatpush1.bf16.msra.mxu0 %v144
    %162 = vmatprep.subr.bf16.mxu0 0
    %163 = vmatpush1.bf16.msra.mxu0 %v145
    %164 = vmatprep.subr.bf16.mxu0 0
    %165 = vmatpush1.bf16.msra.mxu0 %v146
    %166 = vmatprep.subr.bf16.mxu0 0
    %167 = vmatpush1.bf16.msra.mxu0 %v147
    %168 = vmatprep.subr.bf16.mxu0 0
    %169 = vmatpush1.bf16.msra.mxu0 %v148
    %170 = vmatprep.subr.bf16.mxu0 0
    %171 = vmatpush1.bf16.msra.mxu0 %v149
    %172 = vmatprep.subr.bf16.mxu0 0
    %173 = vmatpush1.bf16.msra.mxu0 %v150
    %174 = vmatprep.subr.bf16.mxu0 0
    %175 = vmatpush1.bf16.msra.mxu0 %v151
    %176 = vmatprep.subr.bf16.mxu0 0
    %177 = vmatpush1.bf16.msra.mxu0 0
    %178 = vmatprep.subr.bf16.mxu0 0
    %179 = vmatpush1.bf16.msra.mxu0 0
    %180 = vmatprep.subr.bf16.mxu0 0
    %181 = vmatpush1.bf16.msra.mxu0 0
    %182 = vmatprep.subr.bf16.mxu0 0
    %183 = vmatpush1.bf16.msra.mxu0 0
    %184 = vmatprep.subr.bf16.mxu0 0
    %185 = vmatpush1.bf16.msra.mxu0 0
    %186 = vmatprep.subr.bf16.mxu0 0
    %187 = vmatpush1.bf16.msra.mxu0 0
    %188 = vmatprep.subr.bf16.mxu0 0
    %189 = vmatpush1.bf16.msra.mxu0 0
    %190 = vmatprep.subr.bf16.mxu0 0
    %191 = vmatpush1.bf16.msra.mxu0 0
    %192 = vmatprep.mubr.bf16.mxu0 0
    %193 = vmatmul.mubr.bf16.gmra.mrb[0].mxu0 %v88
    %v194 = vpop.f32.mrb[0].mxu0
    %v195 = vadd.f32 %v110, %v194
    %v196 = vpop.f32.mrb[0].mxu0
    %v197 = vpop.f32.mrb[0].mxu0
    %v198 = vpop.f32.mrb[0].mxu0
    %199 = vdwg.mxu0
    %vm200 = vcmp.ge.f32.partialorder %v195, 0.0
    %v201 = vmul.f32 %v195, 0.01
    %v202 = vsel %vm200, %v195, %v201
    %v203 = vpack.c.bf16 %v202, %v202
    %v204 = vld [vmem:[#allocation7] sm:$0xf]
    %v205 = vld [vmem:[#allocation7 + $0x4] sm:$0xf]
    %v206 = vld [vmem:[#allocation7 + $0x8] sm:$0xf]
    %v207 = vld [vmem:[#allocation7 + $0xc] sm:$0xf]
    %v208 = vld [vmem:[#allocation7 + $0x10] sm:$0xf]
    %v209 = vld [vmem:[#allocation7 + $0x14] sm:$0xf]
    %v210 = vld [vmem:[#allocation7 + $0x18] sm:$0xf]
    %v211 = vld [vmem:[#allocation7 + $0x1c] sm:$0xf]
    %v212 = vld [vmem:[#allocation7 + $0x20] sm:$0xf]
    %v213 = vld [vmem:[#allocation7 + $0x24] sm:$0xf]
    %v214 = vld [vmem:[#allocation7 + $0x28] sm:$0xf]
    %v215 = vld [vmem:[#allocation7 + $0x2c] sm:$0xf]
    %v216 = vld [vmem:[#allocation7 + $0x30] sm:$0xf]
    %v217 = vld [vmem:[#allocation7 + $0x34] sm:$0xf]
    %v218 = vld [vmem:[#allocation7 + $0x38] sm:$0xf]
    %v219 = vld [vmem:[#allocation7 + $0x3c] sm:$0xf]
    %v220 = vld [vmem:[%s4] sm:$0x1]
    %v222 = vlaneseq
    %v223 = vshrl.u32 %v222, 7
    %v224 = vsub.s32 0, %v223
    %v225 = vrot.slane %v220, %v224
    %v243 = vunpack.c.l.b16 %v204
    %v244 = vunpack.c.l.b16 %v205
    %v245 = vunpack.c.l.b16 %v206
    %v246 = vunpack.c.l.b16 %v207
    %v247 = vunpack.c.l.b16 %v208
    %v248 = vunpack.c.l.b16 %v209
    %v249 = vunpack.c.l.b16 %v210
    %v250 = vunpack.c.l.b16 %v211
    %v251 = vunpack.c.l.b16 %v212
    %v252 = vunpack.c.l.b16 %v213
    %v253 = vunpack.c.l.b16 %v214
    %v254 = vunpack.c.l.b16 %v215
    %v255 = vunpack.c.l.b16 %v216
    %v256 = vunpack.c.l.b16 %v217
    %v257 = vunpack.c.l.b16 %v218
    %v258 = vunpack.c.l.b16 %v219
    %v259 = vpack.c.b16 %v244, %v243
    %v260 = vpack.c.b16 %v246, %v245
    %v261 = vpack.c.b16 %v248, %v247
    %v262 = vpack.c.b16 %v250, %v249
    %v263 = vpack.c.b16 %v252, %v251
    %v264 = vpack.c.b16 %v254, %v253
    %v265 = vpack.c.b16 %v256, %v255
    %v266 = vpack.c.b16 %v258, %v257
    %275 = vmatprep.subr.bf16.mxu0 0
    %276 = vmatpush1.bf16.msra.mxu0 %v259
    %277 = vmatprep.subr.bf16.mxu0 0
    %278 = vmatpush1.bf16.msra.mxu0 %v260
    %279 = vmatprep.subr.bf16.mxu0 0
    %280 = vmatpush1.bf16.msra.mxu0 %v261
    %281 = vmatprep.subr.bf16.mxu0 0
    %282 = vmatpush1.bf16.msra.mxu0 %v262
    %283 = vmatprep.subr.bf16.mxu0 0
    %284 = vmatpush1.bf16.msra.mxu0 %v263
    %285 = vmatprep.subr.bf16.mxu0 0
    %286 = vmatpush1.bf16.msra.mxu0 %v264
    %287 = vmatprep.subr.bf16.mxu0 0
    %288 = vmatpush1.bf16.msra.mxu0 %v265
    %289 = vmatprep.subr.bf16.mxu0 0
    %290 = vmatpush1.bf16.msra.mxu0 %v266
    %291 = vmatprep.subr.bf16.mxu0 0
    %292 = vmatpush1.bf16.msra.mxu0 0
    %293 = vmatprep.subr.bf16.mxu0 0
    %294 = vmatpush1.bf16.msra.mxu0 0
    %295 = vmatprep.subr.bf16.mxu0 0
    %296 = vmatpush1.bf16.msra.mxu0 0
    %297 = vmatprep.subr.bf16.mxu0 0
    %298 = vmatpush1.bf16.msra.mxu0 0
    %299 = vmatprep.subr.bf16.mxu0 0
    %300 = vmatpush1.bf16.msra.mxu0 0
    %301 = vmatprep.subr.bf16.mxu0 0
    %302 = vmatpush1.bf16.msra.mxu0 0
    %303 = vmatprep.subr.bf16.mxu0 0
    %304 = vmatpush1.bf16.msra.mxu0 0
    %305 = vmatprep.subr.bf16.mxu0 0
    %306 = vmatpush1.bf16.msra.mxu0 0
    %307 = vmatprep.mubr.bf16.mxu0 0
    %308 = vmatmul.mubr.bf16.gmra.mrb[0].mxu0 %v203
    %v309 = vpop.f32.mrb[0].mxu0
    %v310 = vadd.f32 %v225, %v309
    %v311 = vpop.f32.mrb[0].mxu0
    %v312 = vpop.f32.mrb[0].mxu0
    %v313 = vpop.f32.mrb[0].mxu0
    %314 = vdwg.mxu0
    %v315 = vadd.f32 %v310, %v87
    %316 = vadd.xlane.f32.xlu0 %v315
    %v317 = vpop.xlane.xlu0 %316
    %v318 = vmul.f32 %v317, 0.03125
    %v319 = vmul.f32 %v315, %v315
    %320 = vadd.xlane.f32.xlu0 %v319
    %v321 = vpop.xlane.xlu0 %320
    %v322 = vmul.f32 %v321, 0.03125
    %v323 = vmul.f32 %v318, %v318
    %v324 = vsub.f32 %v322, %v323
    %v325 = vsub.f32 %v315, %v318
    %v326 = vadd.f32 %v324, 1e-05
    %v327 = vrsqrt.pop %v326
    %v328 = vmul.f32 %v325, %v327
    %v329 = vld [vmem:[%s5] sm:$0x1]
    %v331 = vlaneseq
    %v332 = vshrl.u32 %v331, 7
    %v333 = vsub.s32 0, %v332
    %v334 = vrot.slane %v329, %v333
    %v336 = vmul.f32 %v328, %v334
    %v337 = vld [vmem:[%s6] sm:$0x1]
    %v339 = vlaneseq
    %v340 = vshrl.u32 %v339, 7
    %v341 = vsub.s32 0, %v340
    %v342 = vrot.slane %v337, %v341
    %v344 = vadd.f32 %v336, %v342
    %v345 = vpack.c.bf16 %v344, %v344
    %v346 = vld [vmem:[#allocation8] sm:$0xf]
    %v347 = vld [vmem:[#allocation8 + $0x4] sm:$0xf]
    %v348 = vld [vmem:[#allocation8 + $0x8] sm:$0xf]
    %v349 = vld [vmem:[#allocation8 + $0xc] sm:$0xf]
    %v350 = vld [vmem:[#allocation8 + $0x10] sm:$0xf]
    %v351 = vld [vmem:[#allocation8 + $0x14] sm:$0xf]
    %v352 = vld [vmem:[#allocation8 + $0x18] sm:$0xf]
    %v353 = vld [vmem:[#allocation8 + $0x1c] sm:$0xf]
    %v354 = vld [vmem:[#allocation8 + $0x20] sm:$0xf]
    %v355 = vld [vmem:[#allocation8 + $0x24] sm:$0xf]
    %v356 = vld [vmem:[#allocation8 + $0x28] sm:$0xf]
    %v357 = vld [vmem:[#allocation8 + $0x2c] sm:$0xf]
    %v358 = vld [vmem:[#allocation8 + $0x30] sm:$0xf]
    %v359 = vld [vmem:[#allocation8 + $0x34] sm:$0xf]
    %v360 = vld [vmem:[#allocation8 + $0x38] sm:$0xf]
    %v361 = vld [vmem:[#allocation8 + $0x3c] sm:$0xf]
    %v362 = vld [vmem:[%s8] sm:$0x1]
    %v364 = vlaneseq
    %v365 = vshrl.u32 %v364, 7
    %v366 = vsub.s32 0, %v365
    %v367 = vrot.slane %v362, %v366
    %v385 = vunpack.c.l.b16 %v346
    %v386 = vunpack.c.l.b16 %v347
    %v387 = vunpack.c.l.b16 %v348
    %v388 = vunpack.c.l.b16 %v349
    %v389 = vunpack.c.l.b16 %v350
    %v390 = vunpack.c.l.b16 %v351
    %v391 = vunpack.c.l.b16 %v352
    %v392 = vunpack.c.l.b16 %v353
    %v393 = vunpack.c.l.b16 %v354
    %v394 = vunpack.c.l.b16 %v355
    %v395 = vunpack.c.l.b16 %v356
    %v396 = vunpack.c.l.b16 %v357
    %v397 = vunpack.c.l.b16 %v358
    %v398 = vunpack.c.l.b16 %v359
    %v399 = vunpack.c.l.b16 %v360
    %v400 = vunpack.c.l.b16 %v361
    %v401 = vpack.c.b16 %v386, %v385
    %v402 = vpack.c.b16 %v388, %v387
    %v403 = vpack.c.b16 %v390, %v389
    %v404 = vpack.c.b16 %v392, %v391
    %v405 = vpack.c.b16 %v394, %v393
    %v406 = vpack.c.b16 %v396, %v395
    %v407 = vpack.c.b16 %v398, %v397
    %v408 = vpack.c.b16 %v400, %v399
    %417 = vmatprep.subr.bf16.mxu0 0
    %418 = vmatpush1.bf16.msra.mxu0 %v401
    %419 = vmatprep.subr.bf16.mxu0 0
    %420 = vmatpush1.bf16.msra.mxu0 %v402
    %421 = vmatprep.subr.bf16.mxu0 0
    %422 = vmatpush1.bf16.msra.mxu0 %v403
    %423 = vmatprep.subr.bf16.mxu0 0
    %424 = vmatpush1.bf16.msra.mxu0 %v404
    %425 = vmatprep.subr.bf16.mxu0 0
    %426 = vmatpush1.bf16.msra.mxu0 %v405
    %427 = vmatprep.subr.bf16.mxu0 0
    %428 = vmatpush1.bf16.msra.mxu0 %v406
    %429 = vmatprep.subr.bf16.mxu0 0
    %430 = vmatpush1.bf16.msra.mxu0 %v407
    %431 = vmatprep.subr.bf16.mxu0 0
    %432 = vmatpush1.bf16.msra.mxu0 %v408
    %433 = vmatprep.subr.bf16.mxu0 0
    %434 = vmatpush1.bf16.msra.mxu0 0
    %435 = vmatprep.subr.bf16.mxu0 0
    %436 = vmatpush1.bf16.msra.mxu0 0
    %437 = vmatprep.subr.bf16.mxu0 0
    %438 = vmatpush1.bf16.msra.mxu0 0
    %439 = vmatprep.subr.bf16.mxu0 0
    %440 = vmatpush1.bf16.msra.mxu0 0
    %441 = vmatprep.subr.bf16.mxu0 0
    %442 = vmatpush1.bf16.msra.mxu0 0
    %443 = vmatprep.subr.bf16.mxu0 0
    %444 = vmatpush1.bf16.msra.mxu0 0
    %445 = vmatprep.subr.bf16.mxu0 0
    %446 = vmatpush1.bf16.msra.mxu0 0
    %447 = vmatprep.subr.bf16.mxu0 0
    %448 = vmatpush1.bf16.msra.mxu0 0
    %449 = vmatprep.mubr.bf16.mxu0 0
    %450 = vmatmul.mubr.bf16.gmra.mrb[0].mxu0 %v345
    %v451 = vpop.f32.mrb[0].mxu0
    %v452 = vadd.f32 %v367, %v451
    %v453 = vpop.f32.mrb[0].mxu0
    %v454 = vpop.f32.mrb[0].mxu0
    %v455 = vpop.f32.mrb[0].mxu0
    %456 = vdwg.mxu0
    %457 = vst [vmem:[#allocation10] sm:$0xff] %v452
    // Predicated region
    $region54: #{tpu_custom_call.1} parent=1 // pred_check
      _
    $region55: #{tpu_custom_call.1} parent=1 // pred_check_branch
      %459 = sbr.rel (0) target = $region57
    $region56: #{tpu_custom_call.1} parent=1 // pred_region
      %s461 = ssub.s32 128, 128
      %462 = vsyncadd [#allocation4], %s461
      %s464 = sshll.u32 [#allocation10], 4
      %s465 = int_to_ptr.vmem [resolvable:$true] %s464
      %467 = dma.vmem_to_hbm [thread:$0]  %s465, 128, %s9, [#allocation4]
    $region57: #{tpu_custom_call.1} parent=1 // pred_fallthru
      _
    // Predicated region
    $region58: #{tpu_custom_call.1} parent=1 // pred_check
      _
    $region59: #{tpu_custom_call.1} parent=1 // pred_check_branch
      %469 = sbr.rel (0) target = $region61
    $region60: #{tpu_custom_call.1} parent=1 // pred_region
      %470 = dma.done [#allocation4], 128
    $region61: #{tpu_custom_call.1} parent=1 // pred_fallthru
      _
    %471 = vsyncpa [#allocation3], 1
    %472 = vsyncpa [#allocation6], 1
    %473 = vsyncpa [#allocation9], 1
    %474 = vsyncpa [#allocation4], 1

</llo_original>
